<compile_context>
chip_gen: v5e
topology: v5e:2x2
jax: 0.10.0
libtpu: 0.0.40
codegen_flags: <defaults>
</compile_context>

<pallas_src>
import functools

import jax
import jax.numpy as jnp
from jax.experimental import pallas as pl
from jax.experimental.pallas import tpu as pltpu


def _tgcn_kernel(x_ref, w2_ref, a_ref, beff_ref, o_ref, *, partitions,
                 compute_dtype):
    # x_ref:    (C_in, TLV)        input dtype; lane-dense (t, v) flattening
    # w2_ref:   (OC, P*C_in)       compute dtype; regrouped 1x1-conv weight
    # a_ref:    (P, TLV, TLV)      compute dtype; block-diagonal adjacency
    # beff_ref: (OC, TLV)          f32; bias folded through A (tiled over time)
    # o_ref:    (OC, TLV)          out dtype
    x = x_ref[...].astype(compute_dtype)                     # in-kernel cast

    # Graph conv applied to x first (C_in rows -> minimal MXU work for the
    # inflated block-diagonal matmul), one partition at a time.
    xa_parts = []
    for p in range(partitions):
        xa_p = jnp.dot(x, a_ref[p], preferred_element_type=jnp.float32)
        xa_parts.append(xa_p.astype(compute_dtype))
    xa = jnp.concatenate(xa_parts, axis=0)                   # (P*C_in, TLV)

    # Fused 1x1 conv + partition sum: single matmul with K = P*C_in,
    # f32 accumulation, bias (pre-folded through A) added once.
    acc = beff_ref[...] + jnp.dot(w2_ref[...], xa,
                                  preferred_element_type=jnp.float32)
    o_ref[...] = acc.astype(o_ref.dtype)


def _choose_tiling(L, V, max_lanes=256):
    """Pick (TL, Vp): minimal zero-padding of V and the largest divisor TL of
    L such that TL*Vp is a multiple of 128 and <= max_lanes (MXU-native lane
    width; 256 for v6e/v7x, use 128 on v5e)."""
    max_lanes = max(128, max_lanes)
    vp_hi = ((max(V, 1) + 127) // 128) * 128
    for vp in range(V, vp_hi + 1):
        best = None
        for tl in range(1, L + 1):
            if L % tl == 0 and (tl * vp) % 128 == 0 and tl * vp <= max_lanes:
                best = tl
        if best is not None:
            return best, vp
    # Always reachable: Vp a multiple of 128 with a single time step.
    return 1, vp_hi


def make_conv_temporal_graphical(A, W, b, *, partitions, out_channels, seq_len,
                                 compute_dtype=jnp.float32,
                                 out_dtype=jnp.float32, max_lanes=256):
    """Builds the forward fn, precomputing per-layer constants ONCE.

    Args:
      A: (P, V, V)     adjacency matrices (per-layer constant)
      W: (P*OC, C_in)  1x1 conv weight (squeezed from (O, C, 1, 1))
      b: (P*OC,)       conv bias
      seq_len: L (temporal length the layer will be called with)
    Returns:
      forward(x) with x: (N, C_in, L, V) -> (N, OC, L, V) in out_dtype.
    """
    P, OC = partitions, out_channels
    assert A.ndim == 3 and A.shape[0] == P and A.shape[1] == A.shape[2], A.shape
    V = A.shape[-1]
    C_in = W.shape[1]
    assert W.shape == (P * OC, C_in), W.shape
    assert b.shape == (P * OC,), b.shape
    L = seq_len

    TL, Vp = _choose_tiling(L, V, max_lanes=max_lanes)
    TLV = TL * Vp

    # Zero-pad A to the lane-friendly node count (padded rows/cols are zero,
    # so padded graph nodes contribute nothing and padded outputs are zero).
    Ap = A if Vp == V else jnp.pad(A, ((0, 0), (0, Vp - V), (0, Vp - V)))

    # Block-diagonal adjacency A_bd[p] = I_TL (kron) Ap[p]: lets the graph
    # matmul run lane-dense over the flattened (t, v) axis.
    eye = jnp.eye(TL, dtype=Ap.dtype)
    A_bd = jnp.einsum('ts,pwv->ptwsv', eye, Ap).reshape(P, TLV, TLV)
    A_bd = A_bd.astype(compute_dtype)

    # Regroup the 1x1-conv weight so the partition sum fuses into one matmul:
    #   W2[oc, p*C_in + c] = W[p*OC + oc, c]
    W2 = (W.reshape(P, OC, C_in).transpose(1, 0, 2)
           .reshape(OC, P * C_in).astype(compute_dtype))

    # Bias folded through A (time-independent), precomputed once in f32:
    #   beff[oc, v] = sum_p b[p*OC+oc] * sum_w A[p, w, v]
    beff_v = jnp.einsum('po,pv->ov', b.reshape(P, OC), Ap.sum(axis=1))
    beff = jnp.tile(beff_v, (1, TL)).astype(jnp.float32)      # (OC, TLV)

    kernel = functools.partial(_tgcn_kernel, partitions=P,
                               compute_dtype=compute_dtype)

    def forward(x):
        N, c, l, v = x.shape
        assert (c, l, v) == (C_in, L, V), (x.shape, (C_in, L, V))
        if Vp != V:
            # TODO(synk): push the V padding into the kernel DMA to avoid this
            # extra HBM pass for lane-unfriendly V.
            x_p = jnp.pad(x, ((0, 0), (0, 0), (0, 0), (0, Vp - V)))
        else:
            x_p = x
        # Lane folding: contiguous reshape only (no transpose, no cast).
        x2 = x_p.reshape(N, C_in, L * Vp)

        out2 = pl.pallas_call(
            kernel,
            out_shape=jax.ShapeDtypeStruct((N, OC, L * Vp), out_dtype),
            grid=(N, L // TL),
            in_specs=[
                pl.BlockSpec((None, C_in, TLV), lambda n, t: (n, 0, t)),
                pl.BlockSpec((OC, P * C_in), lambda n, t: (0, 0)),
                pl.BlockSpec((P, TLV, TLV), lambda n, t: (0, 0, 0)),
                pl.BlockSpec((OC, TLV), lambda n, t: (0, 0)),
            ],
            out_specs=pl.BlockSpec((None, OC, TLV), lambda n, t: (n, 0, t)),
            compiler_params=pltpu.CompilerParams(
                dimension_semantics=("parallel", "parallel")),
        )(x2, W2, A_bd, beff)

        out = out2.reshape(N, OC, L, Vp)
        if Vp != V:
            out = out[..., :V]
        return out

    return forward


def conv_temporal_graphical(x, A, W, b, *, partitions, out_channels,
                            compute_dtype=jnp.float32, out_dtype=jnp.float32,
                            max_lanes=256):
    """One-shot convenience wrapper (prefer the factory: it caches constants)."""
    return make_conv_temporal_graphical(
        A, W, b, partitions=partitions, out_channels=out_channels,
        seq_len=x.shape[2], compute_dtype=compute_dtype, out_dtype=out_dtype,
        max_lanes=max_lanes)(x)


def _reference(x, A, W, b, *, partitions, out_channels):
    """Pure-JAX replica of the PyTorch forward (defaults: 1x1 temporal conv)."""
    N, C_in, L, V = x.shape
    P, OC = partitions, out_channels
    conv = jnp.einsum('oc,nclv->nolv', W, x) + b[None, :, None, None]
    xv = conv.reshape(N, P, OC * L, V)
    y = jnp.einsum('npmw,pwv->npmv', xv, A)        # torch.matmul(x, A)
    return jnp.sum(y, axis=1).reshape(N, OC, L, V)


if __name__ == "__main__":
    key = jax.random.PRNGKey(0)

    # --- Case 1: lane-friendly V (no padding), f32 and bf16 compute paths. ---
    N, C_in, L, V = 2, 4, 8, 16     # batch, in_channels, seq len, graph nodes
    OC, P = 8, 3                    # out_channels, partitions (spatial kernel)
    kx, ka, kw, kb = jax.random.split(key, 4)
    x = jax.random.normal(kx, (N, C_in, L, V), dtype=jnp.float32)
    A = jax.random.normal(ka, (P, V, V), dtype=jnp.float32)
    W = jax.random.normal(kw, (P * OC, C_in), dtype=jnp.float32) * 0.1
    b = jax.random.normal(kb, (P * OC,), dtype=jnp.float32) * 0.1

    ref = _reference(x, A, W, b, partitions=P, out_channels=OC)

    fwd = make_conv_temporal_graphical(A, W, b, partitions=P, out_channels=OC,
                                       seq_len=L)
    out = jax.block_until_ready(fwd(x))
    assert out.shape == (N, OC, L, V), out.shape
    assert jnp.allclose(out, ref, atol=1e-3, rtol=1e-3), float(
        jnp.max(jnp.abs(out - ref)))

    # bf16 MXU path (f32 accumulation, f32 output): looser tolerance.
    fwd_bf16 = make_conv_temporal_graphical(
        A, W, b, partitions=P, out_channels=OC, seq_len=L,
        compute_dtype=jnp.bfloat16)
    out_bf16 = jax.block_until_ready(fwd_bf16(x))
    assert out_bf16.shape == (N, OC, L, V), out_bf16.shape
    assert jnp.allclose(out_bf16, ref, atol=2e-1, rtol=1e-1), float(
        jnp.max(jnp.abs(out_bf16 - ref)))

    # --- Case 2: lane-unfriendly V (25 joints) -> padded-V tiling path. ---
    N2, C2, L2, V2 = 2, 3, 12, 25
    OC2, P2 = 16, 2
    ks = jax.random.split(key, 8)
    x_b = jax.random.normal(ks[4], (N2, C2, L2, V2), dtype=jnp.float32)
    A_b = jax.random.normal(ks[5], (P2, V2, V2), dtype=jnp.float32)
    W_b = jax.random.normal(ks[6], (P2 * OC2, C2), dtype=jnp.float32) * 0.1
    b_b = jax.random.normal(ks[7], (P2 * OC2,), dtype=jnp.float32) * 0.1

    ref2 = _reference(x_b, A_b, W_b, b_b, partitions=P2, out_channels=OC2)
    fwd2 = make_conv_temporal_graphical(A_b, W_b, b_b, partitions=P2,
                                        out_channels=OC2, seq_len=L2)
    out2 = jax.block_until_ready(fwd2(x_b))
    assert out2.shape == (N2, OC2, L2, V2), out2.shape
    assert jnp.allclose(out2, ref2, atol=1e-3, rtol=1e-3), float(
        jnp.max(jnp.abs(out2 - ref2)))

    print("KERNEL_OK")
</pallas_src>

<mosaic_0001>
module attributes {stable_mosaic.version = 11 : i64} {
  func.func @_tgcn_kernel(%arg0: i32, %arg1: i32, %arg2: memref<1x4x128xf32, #tpu.memory_space<vmem>>, %arg3: memref<8x12xf32, #tpu.memory_space<vmem>>, %arg4: memref<3x128x128xf32, #tpu.memory_space<vmem>>, %arg5: memref<8x128xf32, #tpu.memory_space<vmem>>, %arg6: memref<1x8x128xf32, #tpu.memory_space<vmem>>) attributes {dimension_semantics = [#tpu.dimension_semantics<parallel>, #tpu.dimension_semantics<parallel>], iteration_bounds = array<i64: 2, 1>, scalar_prefetch = 0 : i64, scratch_operands = 0 : i64, tpu.core_type = #tpu.core_type<tc>, window_params = [{transform_indices = @transform_0, window_bounds = array<i64: 1, 4, 128>}, {pipeline_mode = #tpu.pipeline_mode<synchronous>, transform_indices = @transform_1, window_bounds = array<i64: 8, 12>}, {pipeline_mode = #tpu.pipeline_mode<synchronous>, transform_indices = @transform_2, window_bounds = array<i64: 3, 128, 128>}, {pipeline_mode = #tpu.pipeline_mode<synchronous>, transform_indices = @transform_3, window_bounds = array<i64: 8, 128>}, {transform_indices = @transform_4, window_bounds = array<i64: 1, 8, 128>}]} {
    %c0 = arith.constant 0 : index
    %c0_0 = arith.constant 0 : index
    %c0_1 = arith.constant 0 : index
    %0 = vector.load %arg2[%c0, %c0_0, %c0_1] : memref<1x4x128xf32, #tpu.memory_space<vmem>>, vector<1x4x128xf32>
    %1 = vector.shape_cast %0 : vector<1x4x128xf32> to vector<4x128xf32>
    %c0_2 = arith.constant 0 : index
    %c0_3 = arith.constant 0 : index
    %c0_4 = arith.constant 0 : index
    %2 = vector.load %arg4[%c0_2, %c0_3, %c0_4] : memref<3x128x128xf32, #tpu.memory_space<vmem>>, vector<1x128x128xf32>
    %3 = vector.shape_cast %2 : vector<1x128x128xf32> to vector<128x128xf32>
    %cst = arith.constant dense<0.000000e+00> : vector<4x128xf32>
    %4 = tpu.matmul %1, %3, %cst {dimension_numbers = #tpu.dot_dimension_numbers<[1], [0], [0], [1], [0, 0, 1, 1], [], []>} : vector<4x128xf32>, vector<128x128xf32>, vector<4x128xf32> -> vector<4x128xf32>
    %c1 = arith.constant 1 : index
    %c0_5 = arith.constant 0 : index
    %c0_6 = arith.constant 0 : index
    %5 = vector.load %arg4[%c1, %c0_5, %c0_6] : memref<3x128x128xf32, #tpu.memory_space<vmem>>, vector<1x128x128xf32>
    %6 = vector.shape_cast %5 : vector<1x128x128xf32> to vector<128x128xf32>
    %cst_7 = arith.constant dense<0.000000e+00> : vector<4x128xf32>
    %7 = tpu.matmul %1, %6, %cst_7 {dimension_numbers = #tpu.dot_dimension_numbers<[1], [0], [0], [1], [0, 0, 1, 1], [], []>} : vector<4x128xf32>, vector<128x128xf32>, vector<4x128xf32> -> vector<4x128xf32>
    %c2 = arith.constant 2 : index
    %c0_8 = arith.constant 0 : index
    %c0_9 = arith.constant 0 : index
    %8 = vector.load %arg4[%c2, %c0_8, %c0_9] : memref<3x128x128xf32, #tpu.memory_space<vmem>>, vector<1x128x128xf32>
    %9 = vector.shape_cast %8 : vector<1x128x128xf32> to vector<128x128xf32>
    %cst_10 = arith.constant dense<0.000000e+00> : vector<4x128xf32>
    %10 = tpu.matmul %1, %9, %cst_10 {dimension_numbers = #tpu.dot_dimension_numbers<[1], [0], [0], [1], [0, 0, 1, 1], [], []>} : vector<4x128xf32>, vector<128x128xf32>, vector<4x128xf32> -> vector<4x128xf32>
    %11 = tpu.concatenate %4, %7, %10 in 0 : vector<4x128xf32>, vector<4x128xf32>, vector<4x128xf32> -> vector<12x128xf32>
    %c0_11 = arith.constant 0 : index
    %c0_12 = arith.constant 0 : index
    %12 = vector.load %arg5[%c0_11, %c0_12] : memref<8x128xf32, #tpu.memory_space<vmem>>, vector<8x128xf32>
    %c0_13 = arith.constant 0 : index
    %c0_14 = arith.constant 0 : index
    %13 = vector.load %arg3[%c0_13, %c0_14] : memref<8x12xf32, #tpu.memory_space<vmem>>, vector<8x12xf32>
    %cst_15 = arith.constant dense<0.000000e+00> : vector<8x128xf32>
    %14 = tpu.matmul %13, %11, %cst_15 {dimension_numbers = #tpu.dot_dimension_numbers<[1], [0], [0], [1], [0, 0, 1, 1], [], []>} : vector<8x12xf32>, vector<12x128xf32>, vector<8x128xf32> -> vector<8x128xf32>
    %15 = arith.addf %12, %14 : vector<8x128xf32>
    %c0_16 = arith.constant 0 : index
    %c0_17 = arith.constant 0 : index
    %c0_18 = arith.constant 0 : index
    %16 = vector.load %arg6[%c0_16, %c0_17, %c0_18] : memref<1x8x128xf32, #tpu.memory_space<vmem>>, vector<1x8x128xf32>
    %17 = vector.shape_cast %16 : vector<1x8x128xf32> to vector<8x128xf32>
    %18 = vector.shape_cast %15 : vector<8x128xf32> to vector<1x8x128xf32>
    tpu.vector_store %arg6[%c0_16, %c0_17, %c0_18], %18 {strides = array<i32>} : memref<1x8x128xf32, #tpu.memory_space<vmem>>, vector<1x8x128xf32>,
    return
  }
  func.func @transform_0(%arg0: i32, %arg1: i32) -> (i32, i32, i32) {
    %c0_i32 = arith.constant 0 : i32
    %c0_i32_0 = arith.constant 0 : i32
    return %arg0, %c0_i32, %arg1 : i32, i32, i32
  }
  func.func @transform_1(%arg0: i32, %arg1: i32) -> (i32, i32) {
    %c0_i32 = arith.constant 0 : i32
    %c0_i32_0 = arith.constant 0 : i32
    %c0_i32_1 = arith.constant 0 : i32
    return %c0_i32, %c0_i32_0 : i32, i32
  }
  func.func @transform_2(%arg0: i32, %arg1: i32) -> (i32, i32, i32) {
    %c0_i32 = arith.constant 0 : i32
    %c0_i32_0 = arith.constant 0 : i32
    %c0_i32_1 = arith.constant 0 : i32
    %c0_i32_2 = arith.constant 0 : i32
    return %c0_i32, %c0_i32_0, %c0_i32_1 : i32, i32, i32
  }
  func.func @transform_3(%arg0: i32, %arg1: i32) -> (i32, i32) {
    %c0_i32 = arith.constant 0 : i32
    %c0_i32_0 = arith.constant 0 : i32
    %c0_i32_1 = arith.constant 0 : i32
    return %c0_i32, %c0_i32_0 : i32, i32
  }
  func.func @transform_4(%arg0: i32, %arg1: i32) -> (i32, i32, i32) {
    %c0_i32 = arith.constant 0 : i32
    %c0_i32_0 = arith.constant 0 : i32
    return %arg0, %c0_i32, %arg1 : i32, i32, i32
  }
}

</mosaic_0001>

<llo_original>
// kernel: tpu_custom_call.1
$region0: #{tpu_custom_call.1}
  #allocation0 [shape = 'u32[]', space=smem, size = 0x4, offset = 0x4, fixed_abs, tag = 'smem constant byte address 0x4 - core index']
  #allocation1 [shape = 'u32[72,128]{1,0:T(1,128)}', space=vmem, size = 0x9000, scoped, tag = 'internal scratch']
  %s0 = inlined_call_operand.hbm [shape: f32[2,4,128], index: 0, kind: input, shape index: {}]
  %s1 = inlined_call_operand.hbm [shape: f32[8,12], index: 1, kind: input, shape index: {}]
  %s2 = inlined_call_operand.hbm [shape: f32[3,128,128], index: 2, kind: input, shape index: {}]
  %s3 = inlined_call_operand.hbm [shape: f32[8,128], index: 3, kind: input, shape index: {}]
  %s4 = inlined_call_operand.hbm [shape: f32[2,8,128], index: 4, kind: output, shape index: {}]
  %s5 = sld [smem:[#allocation0]]
  $region65: #{tpu_custom_call.1} parent=0
    _
  %s7 = ssub.s32 1, %s5
  %s8 = scalar_select 0, %s7, %s5
  $region1: #{tpu_custom_call.1} parent=0
    #allocation2 [shape = 'u8[4096]{0}', space=vmem, size = 0x1000, scoped, tag = 'input window, operand 0']
    #allocation3 [shape = 's32[2]{0}', space=sflag, size = 0x8, scoped, tag = 'scoped memory for tpu_custom_call.1']
    #allocation4 [shape = 's32[2]{0}', space=sflag, size = 0x8, scoped, tag = 'scoped memory for tpu_custom_call.1']
    #allocation5 [shape = 'u8[4096]{0}', space=vmem, size = 0x1000, scoped, tag = 'input window, operand 1, single buffered']
    #allocation6 [shape = 's32[1]{0}', space=sflag, size = 0x4, scoped, tag = 'scoped memory for tpu_custom_call.1']
    #allocation7 [shape = 'u8[196608]{0}', space=vmem, size = 0x30000, scoped, tag = 'input window, operand 2, single buffered']
    #allocation8 [shape = 'u8[4096]{0}', space=vmem, size = 0x1000, scoped, tag = 'input window, operand 3, single buffered']
    #allocation9 [shape = 's32[1]{0}', space=sflag, size = 0x4, scoped, tag = 'scoped memory for tpu_custom_call.1']
    #allocation10 [shape = 'u8[8192]{0}', space=vmem, size = 0x2000, scoped, tag = 'output window, operand 0']
    %9 = vsyncpa [#allocation3], 0
    %s10 = scalar_lea.sflag [#allocation3], 1
    %11 = vsyncpa %s10, 0
    %12 = vsyncpa [#allocation6], 0
    %13 = vsyncpa [#allocation9], 0
    %14 = vsyncpa [#allocation4], 0
    %s15 = scalar_lea.sflag [#allocation4], 1
    %16 = vsyncpa %s15, 0
    loop: start=0, step=1, limit=4
    $region2: #{tpu_custom_call.1} parent=1 // loop_pre_header
      _
    $region3: #{tpu_custom_call.1} parent=1 // loop_header
      %s18 = sphi 0, %s22
      %p19 = scmp.ge.s32.totalorder %s18, 4
      %s25 = sphi 0, %s37
      %s26 = sphi 0, %s33
      %s27 = sphi 0, %s25
      %s28 = sphi 0, %s26
      %s29 = sphi 0, %s27
      %s30 = sphi 0, %s28
      %s42 = sphi 0, %s44
      %s45 = sphi 0, %s42
      %s46 = sphi 0, %s45
      %s62 = sphi 0, %s46
      %s66 = sphi 0, %s66
      %s68 = sphi 0, %s66
      %s69 = sphi 0, %s68
      %s83 = sphi 0, %s69
      %s87 = sphi 0, %s87
      %s89 = sphi 0, %s87
      %s90 = sphi 0, %s89
      %s104 = sphi 0, %s90
      %s108 = sphi 0, %s108
      %s110 = sphi 0, %s108
      %s111 = sphi 0, %s110
      %s125 = sphi 0, %s111
      %s133 = sphi 0, %s135
      %s136 = sphi 0, %s133
      %s137 = sphi 0, %s136
      %s153 = sphi 0, %s137
    $region4: #{tpu_custom_call.1} parent=1 // loop_header_branch
      %21 = sbr.rel (%p19) target = $region8
    $region5: #{tpu_custom_call.1} parent=1 // loop_body
      %s23 = ssub.s32 %s18, 1
      %s24 = ssub.s32 %s18, 2
      %s31 = sadd.s32 1, %s26
      %p32 = scmp.ge.s32.totalorder %s31, 1
      %s33 = scalar_select %p32, 0, %s31
      %s34 = sadd.s32 1, %s25
      %s35 = scalar_select %p32, %s34, %s25
      %p36 = scmp.ge.s32.totalorder %s35, 2
      %s37 = scalar_select %p36, 0, %s35
      %s38 = ssub.s32 %s25, %s37
      %s39 = ssub.s32 %s26, %s33
      %s40 = sor.u32 %s38, %s39
      %p41 = scmp.eq.s32.totalorder %s40, 0
      %s43 = sadd.s32 %s42, 1
      %s44 = scalar_select %p41, %s42, %s43
      %p47 = pneg %p41
      %p48 = scmp.eq.s32.totalorder %s18, 1
      %p49 = por %p47, %p48
      %p50 = scmp.ne.s32.totalorder %s42, %s45
      %p51 = scmp.eq.s32.totalorder %s18, 0
      %p52 = por %p50, %p51
      %p53 = scmp.ne.s32.totalorder %s42, %s45
      %p54 = scmp.eq.s32.totalorder %s23, 1
      %p55 = por %p53, %p54
      %p56 = scmp.ne.s32.totalorder %s45, %s46
      %p57 = scmp.eq.s32.totalorder %s23, 0
      %p58 = por %p56, %p57
      %p59 = scmp.ne.s32.totalorder %s45, %s46
      %p60 = scmp.eq.s32.totalorder %s24, 1
      %p61 = por %p59, %p60
      %p63 = scmp.ne.s32.totalorder %s46, %s62
      %p64 = scmp.eq.s32.totalorder %s24, 0
      %p65 = por %p63, %p64
      %s67 = sadd.s32 %s66, 1
      %p70 = scmp.eq.s32.totalorder %s18, 1
      %p71 = scmp.ne.s32.totalorder %s66, %s68
      %p72 = scmp.eq.s32.totalorder %s18, 0
      %p73 = por %p71, %p72
      %p74 = scmp.ne.s32.totalorder %s66, %s68
      %p75 = scmp.eq.s32.totalorder %s23, 1
      %p76 = por %p74, %p75
      %p77 = scmp.ne.s32.totalorder %s68, %s69
      %p78 = scmp.eq.s32.totalorder %s23, 0
      %p79 = por %p77, %p78
      %p80 = scmp.ne.s32.totalorder %s68, %s69
      %p81 = scmp.eq.s32.totalorder %s24, 1
      %p82 = por %p80, %p81
      %p84 = scmp.ne.s32.totalorder %s69, %s83
      %p85 = scmp.eq.s32.totalorder %s24, 0
      %p86 = por %p84, %p85
      %s88 = sadd.s32 %s87, 1
      %p91 = scmp.eq.s32.totalorder %s18, 1
      %p92 = scmp.ne.s32.totalorder %s87, %s89
      %p93 = scmp.eq.s32.totalorder %s18, 0
      %p94 = por %p92, %p93
      %p95 = scmp.ne.s32.totalorder %s87, %s89
      %p96 = scmp.eq.s32.totalorder %s23, 1
      %p97 = por %p95, %p96
      %p98 = scmp.ne.s32.totalorder %s89, %s90
      %p99 = scmp.eq.s32.totalorder %s23, 0
      %p100 = por %p98, %p99
      %p101 = scmp.ne.s32.totalorder %s89, %s90
      %p102 = scmp.eq.s32.totalorder %s24, 1
      %p103 = por %p101, %p102
      %p105 = scmp.ne.s32.totalorder %s90, %s104
      %p106 = scmp.eq.s32.totalorder %s24, 0
      %p107 = por %p105, %p106
      %s109 = sadd.s32 %s108, 1
      %p112 = scmp.eq.s32.totalorder %s18, 1
      %p113 = scmp.ne.s32.totalorder %s108, %s110
      %p114 = scmp.eq.s32.totalorder %s18, 0
      %p115 = por %p113, %p114
      %p116 = scmp.ne.s32.totalorder %s108, %s110
      %p117 = scmp.eq.s32.totalorder %s23, 1
      %p118 = por %p116, %p117
      %p119 = scmp.ne.s32.totalorder %s110, %s111
      %p120 = scmp.eq.s32.totalorder %s23, 0
      %p121 = por %p119, %p120
      %p122 = scmp.ne.s32.totalorder %s110, %s111
      %p123 = scmp.eq.s32.totalorder %s24, 1
      %p124 = por %p122, %p123
      %p126 = scmp.ne.s32.totalorder %s111, %s125
      %p127 = scmp.eq.s32.totalorder %s24, 0
      %p128 = por %p126, %p127
      %s129 = ssub.s32 %s25, %s37
      %s130 = ssub.s32 %s26, %s33
      %s131 = sor.u32 %s129, %s130
      %p132 = scmp.eq.s32.totalorder %s131, 0
      %s134 = sadd.s32 %s133, 1
      %s135 = scalar_select %p132, %s133, %s134
      %p138 = pneg %p132
      %p139 = scmp.eq.s32.totalorder %s18, 1
      %p140 = por %p138, %p139
      %p141 = scmp.ne.s32.totalorder %s133, %s136
      %p142 = scmp.eq.s32.totalorder %s18, 0
      %p143 = por %p141, %p142
      %p144 = scmp.ne.s32.totalorder %s133, %s136
      %p145 = scmp.eq.s32.totalorder %s23, 1
      %p146 = por %p144, %p145
      %p147 = scmp.ne.s32.totalorder %s136, %s137
      %p148 = scmp.eq.s32.totalorder %s23, 0
      %p149 = por %p147, %p148
      %p150 = scmp.ne.s32.totalorder %s136, %s137
      %p151 = scmp.eq.s32.totalorder %s24, 1
      %p152 = por %p150, %p151
      %p154 = scmp.ne.s32.totalorder %s137, %s153
      %p155 = scmp.eq.s32.totalorder %s24, 0
      %p156 = por %p154, %p155
      %p157 = scmp.le.s32.totalorder 1, %s18
      %p158 = scmp.lt.s32.totalorder %s18, 3
      %p159 = pnand %p157, %p158
      %p160 = pneg %p159
      // Predicated region
      $region9: #{tpu_custom_call.1} parent=5 // pred_check
        _
      $region10: #{tpu_custom_call.1} parent=5 // pred_check_branch
        %162 = sbr.rel (%p159) target = $region12
      $region11: #{tpu_custom_call.1} parent=5 // pred_region
        %s163 = ssub.s32 %s18, 1
        // Predicated region
        $region13: #{tpu_custom_call.1} parent=11 // pred_check
          %p164 = pneg %p79
        $region14: #{tpu_custom_call.1} parent=11 // pred_check_branch
          %166 = sbr.rel (%p164) target = $region16
        $region15: #{tpu_custom_call.1} parent=11 // pred_region
          %168 = vsyncadd [#allocation6], 0
          %s170 = sshll.u32 %s1, 4
          %s171 = int_to_ptr.hbm [resolvable:$true] %s170
          %s172 = sshll.u32 [#allocation5], 4
          %s173 = int_to_ptr.vmem [resolvable:$true] %s172
          %175 = dma.hbm_to_vmem [thread:$0]  %s171, 128, %s173, [#allocation6]
        $region16: #{tpu_custom_call.1} parent=11 // pred_fallthru
          _
        // Predicated region
        $region17: #{tpu_custom_call.1} parent=11 // pred_check
          %p176 = pneg %p100
        $region18: #{tpu_custom_call.1} parent=11 // pred_check_branch
          %178 = sbr.rel (%p176) target = $region20
        $region19: #{tpu_custom_call.1} parent=11 // pred_region
          %180 = vsyncadd [#allocation6], 0
          %s181 = sshll.u32 %s2, 4
          %s182 = int_to_ptr.hbm [resolvable:$true] %s181
          %s183 = sshll.u32 [#allocation7], 4
          %s184 = int_to_ptr.vmem [resolvable:$true] %s183
          %189 = dma.hbm_to_vmem [thread:$0]  %s182, 6144, %s184, [#allocation6], 128, 128, 8
        $region20: #{tpu_custom_call.1} parent=11 // pred_fallthru
          _
        // Predicated region
        $region21: #{tpu_custom_call.1} parent=11 // pred_check
          %p190 = pneg %p121
        $region22: #{tpu_custom_call.1} parent=11 // pred_check_branch
          %192 = sbr.rel (%p190) target = $region24
        $region23: #{tpu_custom_call.1} parent=11 // pred_region
          %194 = vsyncadd [#allocation9], 0
          %s196 = sshll.u32 %s3, 4
          %s197 = int_to_ptr.hbm [resolvable:$true] %s196
          %s198 = sshll.u32 [#allocation8], 4
          %s199 = int_to_ptr.vmem [resolvable:$true] %s198
          %201 = dma.hbm_to_vmem [thread:$0]  %s197, 128, %s199, [#allocation9]
        $region24: #{tpu_custom_call.1} parent=11 // pred_fallthru
          _
      $region12: #{tpu_custom_call.1} parent=5 // pred_fallthru
        _
      %p202 = scmp.lt.s32.totalorder %s18, 2
      // Predicated region
      $region25: #{tpu_custom_call.1} parent=5 // pred_check
        %p203 = pneg %p202
      $region26: #{tpu_custom_call.1} parent=5 // pred_check_branch
        %205 = sbr.rel (%p203) target = $region28
      $region27: #{tpu_custom_call.1} parent=5 // pred_region
        // Predicated region
        $region29: #{tpu_custom_call.1} parent=27 // pred_check
          %p206 = pneg %p52
        $region30: #{tpu_custom_call.1} parent=27 // pred_check_branch
          %208 = sbr.rel (%p206) target = $region32
        $region31: #{tpu_custom_call.1} parent=27 // pred_region
          %s209 = sand.u32 %s42, 1
          %s210 = scalar_lea.sflag [#allocation3], %s209
          %s211 = sand.u32 %s42, 1
          %s212 = smul.addr %s211, 4
          %s213 = scalar_lea.vmem [#allocation2], %s212
          %215 = vsyncadd %s210, 0
          %s216 = sadd.s32 %s26, %s25
          %s217 = smul.addr %s216, 4
          %s218 = scalar_lea.hbm %s0, %s217
          %s220 = sshll.u32 %s218, 4
          %s221 = int_to_ptr.hbm [resolvable:$true] %s220
          %s222 = sshll.u32 %s213, 4
          %s223 = int_to_ptr.vmem [resolvable:$true] %s222
          %225 = dma.hbm_to_vmem [thread:$0]  %s221, 64, %s223, %s210
        $region32: #{tpu_custom_call.1} parent=27 // pred_fallthru
          _
      $region28: #{tpu_custom_call.1} parent=5 // pred_fallthru
        _
      %p226 = scmp.le.s32.totalorder 1, %s18
      %p227 = scmp.lt.s32.totalorder %s18, 3
      %p228 = pnand %p226, %p227
      %p229 = pneg %p228
      // Predicated region
      $region33: #{tpu_custom_call.1} parent=5 // pred_check
        _
      $region34: #{tpu_custom_call.1} parent=5 // pred_check_branch
        %231 = sbr.rel (%p228) target = $region36
      $region35: #{tpu_custom_call.1} parent=5 // pred_region
        %s232 = ssub.s32 %s18, 1
        %s233 = sand.u32 %s45, 1
        %s234 = scalar_lea.sflag [#allocation3], %s233
        %s235 = sand.u32 %s45, 1
        %s236 = smul.addr %s235, 4
        %s237 = scalar_lea.vmem [#allocation2], %s236
        // Predicated region
        $region37: #{tpu_custom_call.1} parent=35 // pred_check
          %p238 = pneg %p58
        $region38: #{tpu_custom_call.1} parent=35 // pred_check_branch
          %240 = sbr.rel (%p238) target = $region40
        $region39: #{tpu_custom_call.1} parent=35 // pred_region
          %242 = dma.done %s234, 64
        $region40: #{tpu_custom_call.1} parent=35 // pred_fallthru
          _
        // Predicated region
        $region41: #{tpu_custom_call.1} parent=35 // pred_check
          %p243 = pneg %p79
        $region42: #{tpu_custom_call.1} parent=35 // pred_check_branch
          %245 = sbr.rel (%p243) target = $region44
        $region43: #{tpu_custom_call.1} parent=35 // pred_region
          %247 = dma.done [#allocation6], 128
        $region44: #{tpu_custom_call.1} parent=35 // pred_fallthru
          _
        // Predicated region
        $region45: #{tpu_custom_call.1} parent=35 // pred_check
          %p248 = pneg %p100
        $region46: #{tpu_custom_call.1} parent=35 // pred_check_branch
          %250 = sbr.rel (%p248) target = $region48
        $region47: #{tpu_custom_call.1} parent=35 // pred_region
          %252 = dma.done [#allocation6], 6144
        $region48: #{tpu_custom_call.1} parent=35 // pred_fallthru
          _
        // Predicated region
        $region49: #{tpu_custom_call.1} parent=35 // pred_check
          %p253 = pneg %p121
        $region50: #{tpu_custom_call.1} parent=35 // pred_check_branch
          %255 = sbr.rel (%p253) target = $region52
        $region51: #{tpu_custom_call.1} parent=35 // pred_region
          %257 = dma.done [#allocation9], 128
        $region52: #{tpu_custom_call.1} parent=35 // pred_fallthru
          _
        %s258 = sand.u32 %s45, 1
        %s259 = scalar_lea.sflag [#allocation3], %s258
        %s260 = sand.u32 %s45, 1
        %s261 = smul.addr %s260, 4
        %s262 = scalar_lea.vmem [#allocation2], %s261
        %p263 = pneg %p58
        %p264 = pneg %p55
        %p265 = pneg %p79
        %p266 = pneg %p76
        %p267 = pneg %p100
        %p268 = pneg %p97
        %p269 = pneg %p121
        %p270 = pneg %p118
        %p271 = pneg %p149
        %p272 = pneg %p146
        %s273 = sand.u32 %s136, 1
        %s274 = scalar_lea.sflag [#allocation4], %s273
        %s275 = sand.u32 %s136, 1
        %s276 = smul.addr %s275, 8
        %s277 = scalar_lea.vmem [#allocation10], %s276
        %v278 = vld [vmem:[%s237] sm:$0xf]
        %v279 = vld [vmem:[#allocation7] sm:$0xff]
        %v280 = vld [vmem:[#allocation7 + $0x8] sm:$0xff]
        %v281 = vld [vmem:[#allocation7 + $0x10] sm:$0xff]
        %v282 = vld [vmem:[#allocation7 + $0x18] sm:$0xff]
        %v283 = vld [vmem:[#allocation7 + $0x20] sm:$0xff]
        %v284 = vld [vmem:[#allocation7 + $0x28] sm:$0xff]
        %v285 = vld [vmem:[#allocation7 + $0x30] sm:$0xff]
        %v286 = vld [vmem:[#allocation7 + $0x38] sm:$0xff]
        %v287 = vld [vmem:[#allocation7 + $0x40] sm:$0xff]
        %v288 = vld [vmem:[#allocation7 + $0x48] sm:$0xff]
        %v289 = vld [vmem:[#allocation7 + $0x50] sm:$0xff]
        %v290 = vld [vmem:[#allocation7 + $0x58] sm:$0xff]
        %v291 = vld [vmem:[#allocation7 + $0x60] sm:$0xff]
        %v292 = vld [vmem:[#allocation7 + $0x68] sm:$0xff]
        %v293 = vld [vmem:[#allocation7 + $0x70] sm:$0xff]
        %v294 = vld [vmem:[#allocation7 + $0x78] sm:$0xff]
        %295 = vmatpush.msra.mxu0 %v294
        %296 = vmatpush.msra.mxu0 %v293
        %297 = vmatpush.msra.mxu0 %v292
        %298 = vmatpush.msra.mxu0 %v291
        %299 = vmatpush.msra.mxu0 %v290
        %300 = vmatpush.msra.mxu0 %v289
        %301 = vmatpush.msra.mxu0 %v288
        %302 = vmatpush.msra.mxu0 %v287
        %303 = vmatpush.msra.mxu0 %v286
        %304 = vmatpush.msra.mxu0 %v285
        %305 = vmatpush.msra.mxu0 %v284
        %306 = vmatpush.msra.mxu0 %v283
        %307 = vmatpush.msra.mxu0 %v282
        %308 = vmatpush.msra.mxu0 %v281
        %309 = vmatpush.msra.mxu0 %v280
        %310 = vmatpush.msra.mxu0 %v279
        %311 = vmatmul.f32.gmra.mxu0 %v278
        %v312 = vpop.f32.mrf.mxu0
        %v313 = vadd.f32 0.0, %v312
        %314 = vdwg.mxu0
        %s315 = scalar_lea.vmem [#allocation7], 128
        %v316 = vld [vmem:[%s315] sm:$0xff]
        %v317 = vld [vmem:[%s315 + $0x8] sm:$0xff]
        %v318 = vld [vmem:[%s315 + $0x10] sm:$0xff]
        %v319 = vld [vmem:[%s315 + $0x18] sm:$0xff]
        %v320 = vld [vmem:[%s315 + $0x20] sm:$0xff]
        %v321 = vld [vmem:[%s315 + $0x28] sm:$0xff]
        %v322 = vld [vmem:[%s315 + $0x30] sm:$0xff]
        %v323 = vld [vmem:[%s315 + $0x38] sm:$0xff]
        %v324 = vld [vmem:[%s315 + $0x40] sm:$0xff]
        %v325 = vld [vmem:[%s315 + $0x48] sm:$0xff]
        %v326 = vld [vmem:[%s315 + $0x50] sm:$0xff]
        %v327 = vld [vmem:[%s315 + $0x58] sm:$0xff]
        %v328 = vld [vmem:[%s315 + $0x60] sm:$0xff]
        %v329 = vld [vmem:[%s315 + $0x68] sm:$0xff]
        %v330 = vld [vmem:[%s315 + $0x70] sm:$0xff]
        %v331 = vld [vmem:[%s315 + $0x78] sm:$0xff]
        %332 = vmatpush.msra.mxu0 %v331
        %333 = vmatpush.msra.mxu0 %v330
        %334 = vmatpush.msra.mxu0 %v329
        %335 = vmatpush.msra.mxu0 %v328
        %336 = vmatpush.msra.mxu0 %v327
        %337 = vmatpush.msra.mxu0 %v326
        %338 = vmatpush.msra.mxu0 %v325
        %339 = vmatpush.msra.mxu0 %v324
        %340 = vmatpush.msra.mxu0 %v323
        %341 = vmatpush.msra.mxu0 %v322
        %342 = vmatpush.msra.mxu0 %v321
        %343 = vmatpush.msra.mxu0 %v320
        %344 = vmatpush.msra.mxu0 %v319
        %345 = vmatpush.msra.mxu0 %v318
        %346 = vmatpush.msra.mxu0 %v317
        %347 = vmatpush.msra.mxu0 %v316
        %348 = vmatmul.f32.gmra.mxu0 %v278
        %v349 = vpop.f32.mrf.mxu0
        %v350 = vadd.f32 0.0, %v349
        %351 = vdwg.mxu0
        %s352 = scalar_lea.vmem [#allocation7], 256
        %v353 = vld [vmem:[%s352] sm:$0xff]
        %v354 = vld [vmem:[%s352 + $0x8] sm:$0xff]
        %v355 = vld [vmem:[%s352 + $0x10] sm:$0xff]
        %v356 = vld [vmem:[%s352 + $0x18] sm:$0xff]
        %v357 = vld [vmem:[%s352 + $0x20] sm:$0xff]
        %v358 = vld [vmem:[%s352 + $0x28] sm:$0xff]
        %v359 = vld [vmem:[%s352 + $0x30] sm:$0xff]
        %v360 = vld [vmem:[%s352 + $0x38] sm:$0xff]
        %v361 = vld [vmem:[%s352 + $0x40] sm:$0xff]
        %v362 = vld [vmem:[%s352 + $0x48] sm:$0xff]
        %v363 = vld [vmem:[%s352 + $0x50] sm:$0xff]
        %v364 = vld [vmem:[%s352 + $0x58] sm:$0xff]
        %v365 = vld [vmem:[%s352 + $0x60] sm:$0xff]
        %v366 = vld [vmem:[%s352 + $0x68] sm:$0xff]
        %v367 = vld [vmem:[%s352 + $0x70] sm:$0xff]
        %v368 = vld [vmem:[%s352 + $0x78] sm:$0xff]
        %369 = vmatpush.msra.mxu0 %v368
        %370 = vmatpush.msra.mxu0 %v367
        %371 = vmatpush.msra.mxu0 %v366
        %372 = vmatpush.msra.mxu0 %v365
        %373 = vmatpush.msra.mxu0 %v364
        %374 = vmatpush.msra.mxu0 %v363
        %375 = vmatpush.msra.mxu0 %v362
        %376 = vmatpush.msra.mxu0 %v361
        %377 = vmatpush.msra.mxu0 %v360
        %378 = vmatpush.msra.mxu0 %v359
        %379 = vmatpush.msra.mxu0 %v358
        %380 = vmatpush.msra.mxu0 %v357
        %381 = vmatpush.msra.mxu0 %v356
        %382 = vmatpush.msra.mxu0 %v355
        %383 = vmatpush.msra.mxu0 %v354
        %384 = vmatpush.msra.mxu0 %v353
        %385 = vmatmul.f32.gmra.mxu0 %v278
        %v386 = vpop.f32.mrf.mxu0
        %v387 = vadd.f32 0.0, %v386
        %388 = vdwg.mxu0
        %v390 = vrot.slane %v350, 4
        %vm392 = vcmask 1043456
        %v393 = vsel %vm392, %v313, %v390
        %v394 = vld [vmem:[#allocation8] sm:$0xff]
        %v395 = vld [vmem:[#allocation5] sm:$0xff]
        %vm396 = vcmask 97280
        %v398 = vsel %vm396, %v395, 0
        %v401 = vsel %vm392, %v387, 0
        %403 = vmatpush.msra.mxu0 0.0
        %404 = vmatpush.msra.mxu0 0.0
        %405 = vmatpush.msra.mxu0 0.0
        %406 = vmatpush.msra.mxu0 0.0
        %407 = vmatpush.msra.mxu0 0.0
        %408 = vmatpush.msra.mxu0 0.0
        %409 = vmatpush.msra.mxu0 0.0
        %410 = vmatpush.msra.mxu0 0.0
        %411 = vmatpush.msra.mxu0 0.0
        %412 = vmatpush.msra.mxu0 0.0
        %413 = vmatpush.msra.mxu0 0.0
        %414 = vmatpush.msra.mxu0 0.0
        %415 = vmatpush.msra.mxu0 0.0
        %416 = vmatpush.msra.mxu0 0.0
        %417 = vmatpush.msra.mxu0 %v401
        %418 = vmatpush.msra.mxu0 %v393
        %419 = vmatmul.f32.gmra.mxu0 %v398
        %v420 = vpop.f32.mrf.mxu0
        %v421 = vadd.f32 0.0, %v420
        %422 = vdwg.mxu0
        %v423 = vadd.f32 %v394, %v421
        %424 = vst [vmem:[%s277] sm:$0xff] %v423
        %s425 = sand.u32 %s136, 1
        %s426 = scalar_lea.sflag [#allocation4], %s425
        %s427 = sand.u32 %s136, 1
        %s428 = smul.addr %s427, 8
        %s429 = scalar_lea.vmem [#allocation10], %s428
        // Predicated region
        $region53: #{tpu_custom_call.1} parent=35 // pred_check
          %p430 = pneg %p146
        $region54: #{tpu_custom_call.1} parent=35 // pred_check_branch
          %432 = sbr.rel (%p430) target = $region56
        $region55: #{tpu_custom_call.1} parent=35 // pred_region
          %434 = vsyncadd %s426, 0
          %s435 = sadd.s32 %s28, %s27
          %s436 = smul.addr %s435, 8
          %s437 = scalar_lea.hbm %s4, %s436
          %s439 = sshll.u32 %s429, 4
          %s440 = int_to_ptr.vmem [resolvable:$true] %s439
          %s441 = sshll.u32 %s437, 4
          %s442 = int_to_ptr.hbm [resolvable:$true] %s441
          %444 = dma.vmem_to_hbm [thread:$0]  %s440, 128, %s442, %s426
        $region56: #{tpu_custom_call.1} parent=35 // pred_fallthru
          _
      $region36: #{tpu_custom_call.1} parent=5 // pred_fallthru
        _
      %p445 = scmp.le.s32.totalorder 2, %s18
      // Predicated region
      $region57: #{tpu_custom_call.1} parent=5 // pred_check
        %p446 = pneg %p445
      $region58: #{tpu_custom_call.1} parent=5 // pred_check_branch
        %448 = sbr.rel (%p446) target = $region60
      $region59: #{tpu_custom_call.1} parent=5 // pred_region
        %s449 = ssub.s32 %s18, 2
        // Predicated region
        $region61: #{tpu_custom_call.1} parent=59 // pred_check
          %p450 = pneg %p152
        $region62: #{tpu_custom_call.1} parent=59 // pred_check_branch
          %452 = sbr.rel (%p450) target = $region64
        $region63: #{tpu_custom_call.1} parent=59 // pred_region
          %s453 = sand.u32 %s137, 1
          %s454 = scalar_lea.sflag [#allocation4], %s453
          %s455 = sand.u32 %s137, 1
          %s456 = smul.addr %s455, 8
          %s457 = scalar_lea.vmem [#allocation10], %s456
          %459 = dma.done %s454, 128
        $region64: #{tpu_custom_call.1} parent=59 // pred_fallthru
          _
      $region60: #{tpu_custom_call.1} parent=5 // pred_fallthru
        _
    $region6: #{tpu_custom_call.1} parent=1 // loop_footer
      %s22 = sadd.s32 1, %s18
    $region7: #{tpu_custom_call.1} parent=1 // loop_footer_branch
      %17 = sbr.rel target = $region3
    $region8: #{tpu_custom_call.1} parent=1 // loop_exit
      _
    %460 = vsyncpa [#allocation3], 1
    %s461 = scalar_lea.sflag [#allocation3], 1
    %462 = vsyncpa %s461, 1
    %463 = vsyncpa [#allocation6], 1
    %464 = vsyncpa [#allocation9], 1
    %465 = vsyncpa [#allocation4], 1
    %s466 = scalar_lea.sflag [#allocation4], 1
    %467 = vsyncpa %s466, 1

</llo_original>
